<compile_context>
chip_gen: v6e
topology: v6e:2x2x1
jax: 0.10.0
libtpu: 0.0.40
codegen_flags: <defaults>
</compile_context>

<pallas_src>
import math

import jax
import jax.numpy as jnp
from jax.experimental import pallas as pl
from jax.experimental.pallas import tpu as pltpu


def _round_up(v, m):
    return ((v + m - 1) // m) * m


# ------------------------- Pallas kernel -------------------------

def _gcn_fused_kernel(a_ref, x_ref, w_ref, o_ref, acc_ref):
    """One (row-tile i, k-tile) step of  out = (A @ x_aug) @ W_aug."""
    k = pl.program_id(1)

    @pl.when(k == 0)
    def _init():
        acc_ref[...] = jnp.zeros_like(acc_ref)

    # acc[i] += A[i, k] @ x_aug[k]   (bf16 operands, f32 MXU accumulation)
    acc_ref[...] += jnp.dot(a_ref[...], x_ref[...],
                            preferred_element_type=jnp.float32)

    @pl.when(k == pl.num_programs(1) - 1)
    def _finalize():
        # out[i] = acc[i] @ W_aug   (linear bias already folded into w_ref)
        o_ref[...] = jnp.dot(acc_ref[...].astype(w_ref.dtype), w_ref[...],
                             preferred_element_type=jnp.float32
                             ).astype(o_ref.dtype)


# ------------------------- wrapper -------------------------

def gcn_conv(x, A, weight, lin_bias=None, *, tm=256, tk=256,
             compute_dtype=jnp.bfloat16,
             extra_bias=None, residual=False, activation=None):
    """GCNConv forward:  A @ (x @ weight.T + lin_bias)  (+ optional extras).

    x:        [N, F_in]      float32
    A:        [N, N]         float32 dense adjacency
    weight:   [F_out, F_in]  (PyTorch nn.Linear layout)
    lin_bias: [F_out] or None
    """
    N, F_in = x.shape
    F_out = weight.shape[0]
    assert tm % 8 == 0 and tk % 128 == 0, "tm must be 8-aligned, tk 128-aligned"

    # Clamp tiles for small graphs while keeping (8,128) alignment.
    tm = min(tm, _round_up(N, 128))
    tk = min(tk, _round_up(N, 128))
    n_pad = _round_up(N, math.lcm(tm, tk))
    fin_pad = _round_up(F_in + 1, 128)   # +1: folded bias column
    fout_pad = _round_up(F_out, 128)     # lane-dense output stores

    cd = compute_dtype

    # x_aug = [x | 1 | 0-pad]; padded rows are harmless (their A columns are 0).
    x_aug = jnp.zeros((n_pad, fin_pad), cd)
    x_aug = x_aug.at[:N, :F_in].set(x.astype(cd))
    x_aug = x_aug.at[:, F_in].set(1.0)

    # W_aug = [[W.T], [b], [0-pad]]  ->  (F_in_pad, F_out_pad)
    w_aug = jnp.zeros((fin_pad, fout_pad), cd)
    w_aug = w_aug.at[:F_in, :F_out].set(weight.T.astype(cd))
    if lin_bias is not None:
        w_aug = w_aug.at[F_in, :F_out].set(lin_bias.astype(cd))

    a_pad = jnp.zeros((n_pad, n_pad), cd)
    a_pad = a_pad.at[:N, :N].set(A.astype(cd))

    # NOTE: this (A@x)@W order costs N^2*F_in FLOPs on the big matmul; if
    # F_out << F_in for a given layer, swap to the A@(xW) order instead.
    out_pad = pl.pallas_call(
        _gcn_fused_kernel,
        out_shape=jax.ShapeDtypeStruct((n_pad, fout_pad), jnp.float32),
        grid_spec=pltpu.PrefetchScalarGridSpec(
            num_scalar_prefetch=0,
            grid=(n_pad // tm, n_pad // tk),            # (row tiles, K tiles)
            in_specs=[
                pl.BlockSpec((tm, tk), lambda i, k: (i, k)),        # A tile
                pl.BlockSpec((tk, fin_pad), lambda i, k: (k, 0)),   # x_aug tile
                pl.BlockSpec((fin_pad, fout_pad), lambda i, k: (0, 0)),  # W_aug (resident)
            ],
            out_specs=pl.BlockSpec((tm, fout_pad), lambda i, k: (i, 0)),
            scratch_shapes=[pltpu.VMEM((tm, fin_pad), jnp.float32)],
        ),
        compiler_params=pltpu.CompilerParams(
            # leading row axis parallel (2-TC sharding on v7x), K axis arbitrary
            dimension_semantics=("parallel", "arbitrary")),
    )(a_pad, x_aug, w_aug)

    out = out_pad[:N, :F_out]

    # Optional GCNConv extras (module defaults: all off). Pure wrapper glue.
    if extra_bias is not None:
        out = out + extra_bias
    if residual:
        out = x + out
    if activation is not None:
        out = activation(out)
    return out


# ------------------------- main -------------------------

if __name__ == "__main__":
    # TODO(synk): sparse=True path (torch.sparse.mm) not implemented — dense adjacency only.
    key = jax.random.PRNGKey(0)
    k_x, k_a, k_w, k_b = jax.random.split(key, 4)

    # Small, deliberately non-tile-aligned shapes to exercise padding + tiling.
    N_nodes, F_in, F_out = 300, 48, 96

    x = jax.random.normal(k_x, (N_nodes, F_in), dtype=jnp.float32)

    # Dense symmetric row-normalized adjacency with self loops.
    raw = jax.random.uniform(k_a, (N_nodes, N_nodes), dtype=jnp.float32)
    adj = (raw + raw.T) * 0.5 + jnp.eye(N_nodes, dtype=jnp.float32)
    A = adj / jnp.sum(adj, axis=1, keepdims=True)

    # nn.Linear.reset_parameters-style init: U(+/- 1/sqrt(fan_in)).
    std = 1.0 / math.sqrt(F_in)
    weight = jax.random.uniform(k_w, (F_out, F_in), minval=-std, maxval=std,
                                dtype=jnp.float32)
    lin_bias = jax.random.uniform(k_b, (F_out,), minval=-std, maxval=std,
                                  dtype=jnp.float32)

    out = gcn_conv(x, A, weight, lin_bias)
    out = jax.block_until_ready(out)

    # Plain-JAX f32 reference of the PyTorch forward.
    ref = A @ (x @ weight.T + lin_bias)
    assert out.shape == (N_nodes, F_out), out.shape
    # bf16 operands with f32 accumulation -> ~1e-3 abs error at these scales.
    max_err = float(jnp.max(jnp.abs(out - ref)))
    assert jnp.allclose(out, ref, atol=3e-2, rtol=3e-2), max_err

    print("KERNEL_OK")
</pallas_src>

<mosaic_0001>
module attributes {stable_mosaic.version = 11 : i64} {
  func.func @_gcn_fused_kernel(%arg0: i32, %arg1: i32, %arg2: memref<256x256xbf16, #tpu.memory_space<vmem>>, %arg3: memref<256x128xbf16, #tpu.memory_space<vmem>>, %arg4: memref<128x128xbf16, #tpu.memory_space<vmem>>, %arg5: memref<256x128xf32, #tpu.memory_space<vmem>>, %arg6: memref<256x128xf32, #tpu.memory_space<vmem>>) attributes {dimension_semantics = [#tpu.dimension_semantics<parallel>, #tpu.dimension_semantics<arbitrary>], iteration_bounds = array<i64: 2, 2>, scalar_prefetch = 0 : i64, scratch_operands = 1 : i64, tpu.core_type = #tpu.core_type<tc>, window_params = [{transform_indices = @transform_0, window_bounds = array<i64: 256, 256>}, {transform_indices = @transform_1, window_bounds = array<i64: 256, 128>}, {pipeline_mode = #tpu.pipeline_mode<synchronous>, transform_indices = @transform_2, window_bounds = array<i64: 128, 128>}, {transform_indices = @transform_3, window_bounds = array<i64: 256, 128>}]} {
    %c0_i32 = arith.constant 0 : i32
    %0 = arith.cmpi eq, %arg1, %c0_i32 : i32
    %1 = arith.extui %0 : i1 to i32
    %c0_i32_0 = arith.constant 0 : i32
    %2 = arith.cmpi ne, %1, %c0_i32_0 : i32
    scf.if %2 {
      %cst_9 = arith.constant 0.000000e+00 : f32
      %12 = vector.broadcast %cst_9 : f32 to vector<256x128xf32>
      %c0_10 = arith.constant 0 : index
      %c0_11 = arith.constant 0 : index
      %13 = vector.load %arg6[%c0_10, %c0_11] : memref<256x128xf32, #tpu.memory_space<vmem>>, vector<256x128xf32>
      tpu.vector_store %arg6[%c0_10, %c0_11], %12 {strides = array<i32>} : memref<256x128xf32, #tpu.memory_space<vmem>>, vector<256x128xf32>,
    } else {
    }
    %c0 = arith.constant 0 : index
    %c0_1 = arith.constant 0 : index
    %3 = vector.load %arg6[%c0, %c0_1] : memref<256x128xf32, #tpu.memory_space<vmem>>, vector<256x128xf32>
    %c0_2 = arith.constant 0 : index
    %c0_3 = arith.constant 0 : index
    %4 = vector.load %arg2[%c0_2, %c0_3] : memref<256x256xbf16, #tpu.memory_space<vmem>>, vector<256x256xbf16>
    %c0_4 = arith.constant 0 : index
    %c0_5 = arith.constant 0 : index
    %5 = vector.load %arg3[%c0_4, %c0_5] : memref<256x128xbf16, #tpu.memory_space<vmem>>, vector<256x128xbf16>
    %cst = arith.constant dense<0.000000e+00> : vector<256x128xf32>
    %6 = tpu.matmul %4, %5, %cst {dimension_numbers = #tpu.dot_dimension_numbers<[1], [0], [0], [1], [0, 0, 1, 1], [], []>} : vector<256x256xbf16>, vector<256x128xbf16>, vector<256x128xf32> -> vector<256x128xf32>
    %7 = arith.addf %3, %6 : vector<256x128xf32>
    %c0_6 = arith.constant 0 : index
    %c0_7 = arith.constant 0 : index
    %8 = vector.load %arg6[%c0_6, %c0_7] : memref<256x128xf32, #tpu.memory_space<vmem>>, vector<256x128xf32>
    tpu.vector_store %arg6[%c0_6, %c0_7], %7 {strides = array<i32>} : memref<256x128xf32, #tpu.memory_space<vmem>>, vector<256x128xf32>,
    %c1_i32 = arith.constant 1 : i32
    %9 = arith.cmpi eq, %arg1, %c1_i32 : i32
    %10 = arith.extui %9 : i1 to i32
    %c0_i32_8 = arith.constant 0 : i32
    %11 = arith.cmpi ne, %10, %c0_i32_8 : i32
    scf.if %11 {
      %c0_9 = arith.constant 0 : index
      %c0_10 = arith.constant 0 : index
      %12 = vector.load %arg6[%c0_9, %c0_10] : memref<256x128xf32, #tpu.memory_space<vmem>>, vector<256x128xf32>
      %13 = arith.truncf %12 : vector<256x128xf32> to vector<256x128xbf16>
      %c0_11 = arith.constant 0 : index
      %c0_12 = arith.constant 0 : index
      %14 = vector.load %arg4[%c0_11, %c0_12] : memref<128x128xbf16, #tpu.memory_space<vmem>>, vector<128x128xbf16>
      %cst_13 = arith.constant dense<0.000000e+00> : vector<256x128xf32>
      %15 = tpu.matmul %13, %14, %cst_13 {dimension_numbers = #tpu.dot_dimension_numbers<[1], [0], [0], [1], [0, 0, 1, 1], [], []>} : vector<256x128xbf16>, vector<128x128xbf16>, vector<256x128xf32> -> vector<256x128xf32>
      %c0_14 = arith.constant 0 : index
      %c0_15 = arith.constant 0 : index
      %16 = vector.load %arg5[%c0_14, %c0_15] : memref<256x128xf32, #tpu.memory_space<vmem>>, vector<256x128xf32>
      tpu.vector_store %arg5[%c0_14, %c0_15], %15 {strides = array<i32>} : memref<256x128xf32, #tpu.memory_space<vmem>>, vector<256x128xf32>,
    } else {
    }
    return
  }
  func.func @transform_0(%arg0: i32, %arg1: i32) -> (i32, i32) {
    %c0_i32 = arith.constant 0 : i32
    return %arg0, %arg1 : i32, i32
  }
  func.func @transform_1(%arg0: i32, %arg1: i32) -> (i32, i32) {
    %c0_i32 = arith.constant 0 : i32
    %c0_i32_0 = arith.constant 0 : i32
    return %arg1, %c0_i32 : i32, i32
  }
  func.func @transform_2(%arg0: i32, %arg1: i32) -> (i32, i32) {
    %c0_i32 = arith.constant 0 : i32
    %c0_i32_0 = arith.constant 0 : i32
    %c0_i32_1 = arith.constant 0 : i32
    return %c0_i32, %c0_i32_0 : i32, i32
  }
  func.func @transform_3(%arg0: i32, %arg1: i32) -> (i32, i32) {
    %c0_i32 = arith.constant 0 : i32
    %c0_i32_0 = arith.constant 0 : i32
    return %arg0, %c0_i32 : i32, i32
  }
}

</mosaic_0001>

<llo_original>
// kernel: tpu_custom_call.1
$region0: #{tpu_custom_call.1}
  #allocation0 [shape = 'u32[]', space=smem, size = 0x4, offset = 0x4, fixed_abs, tag = 'smem constant byte address 0x4 - core index']
  #allocation1 [shape = 'u32[144,128]{1,0:T(1,128)}', space=vmem, size = 0x12000, scoped, tag = 'internal scratch']
  #allocation2 [shape = 'f32[256,128]{1,0:T(8,128)}', space=vmem, size = 0x20000, scoped, tag = 'scratch operand']
  %s0 = inlined_call_operand.hbm [shape: bf16[512,512], index: 0, kind: input, shape index: {}]
  %s1 = inlined_call_operand.hbm [shape: bf16[512,128], index: 1, kind: input, shape index: {}]
  %s2 = inlined_call_operand.hbm [shape: bf16[128,128], index: 2, kind: input, shape index: {}]
  %s3 = inlined_call_operand.hbm [shape: f32[512,128], index: 3, kind: output, shape index: {}]
  %s4 = sld [smem:[#allocation0]]
  $region65: #{tpu_custom_call.1} parent=0
    _
  %s6 = ssub.s32 1, %s4
  %s7 = scalar_select 0, %s6, %s4
  $region1: #{tpu_custom_call.1} parent=0
    #allocation3 [shape = 'u8[262144]{0}', space=vmem, size = 0x40000, scoped, tag = 'input window, operand 0']
    #allocation4 [shape = 's32[2]{0}', space=sflag, size = 0x8, scoped, tag = 'scoped memory for tpu_custom_call.1']
    #allocation5 [shape = 's32[2]{0}', space=sflag, size = 0x8, scoped, tag = 'scoped memory for tpu_custom_call.1']
    #allocation6 [shape = 'u8[131072]{0}', space=vmem, size = 0x20000, scoped, tag = 'input window, operand 1']
    #allocation7 [shape = 's32[2]{0}', space=sflag, size = 0x8, scoped, tag = 'scoped memory for tpu_custom_call.1']
    #allocation8 [shape = 'u8[32768]{0}', space=vmem, size = 0x8000, scoped, tag = 'input window, operand 2, single buffered']
    #allocation9 [shape = 'u8[262144]{0}', space=vmem, size = 0x40000, scoped, tag = 'output window, operand 0']
    %8 = vsyncpa [#allocation4], 0
    %s9 = scalar_lea.sflag [#allocation4], 1
    %10 = vsyncpa %s9, 0
    %11 = vsyncpa [#allocation7], 0
    %s12 = scalar_lea.sflag [#allocation7], 1
    %13 = vsyncpa %s12, 0
    %14 = vsyncpa [#allocation5], 0
    %s15 = scalar_lea.sflag [#allocation5], 1
    %16 = vsyncpa %s15, 0
    loop: start=0, step=1, limit=6
    $region2: #{tpu_custom_call.1} parent=1 // loop_pre_header
      _
    $region3: #{tpu_custom_call.1} parent=1 // loop_header
      %s18 = sphi 0, %s22
      %p19 = scmp.ge.s32.totalorder %s18, 6
      %s25 = sphi 0, %s37
      %s26 = sphi 0, %s33
      %s27 = sphi 0, %s25
      %s28 = sphi 0, %s26
      %s29 = sphi 0, %s27
      %s30 = sphi 0, %s28
      %s42 = sphi 0, %s44
      %s45 = sphi 0, %s42
      %s46 = sphi 0, %s45
      %s62 = sphi 0, %s46
      %s68 = sphi 0, %s70
      %s71 = sphi 0, %s68
      %s72 = sphi 0, %s71
      %s88 = sphi 0, %s72
      %s92 = sphi 0, %s92
      %s94 = sphi 0, %s92
      %s95 = sphi 0, %s94
      %s109 = sphi 0, %s95
      %s115 = sphi 0, %s117
      %s118 = sphi 0, %s115
      %s119 = sphi 0, %s118
      %s135 = sphi 0, %s119
    $region4: #{tpu_custom_call.1} parent=1 // loop_header_branch
      %21 = sbr.rel (%p19) target = $region8
    $region5: #{tpu_custom_call.1} parent=1 // loop_body
      %s23 = ssub.s32 %s18, 1
      %s24 = ssub.s32 %s18, 2
      %s31 = sadd.s32 1, %s26
      %p32 = scmp.ge.s32.totalorder %s31, 2
      %s33 = scalar_select %p32, 0, %s31
      %s34 = sadd.s32 1, %s25
      %s35 = scalar_select %p32, %s34, %s25
      %p36 = scmp.ge.s32.totalorder %s35, 2
      %s37 = scalar_select %p36, 0, %s35
      %s38 = ssub.s32 %s25, %s37
      %s39 = ssub.s32 %s26, %s33
      %s40 = sor.u32 %s38, %s39
      %p41 = scmp.eq.s32.totalorder %s40, 0
      %s43 = sadd.s32 %s42, 1
      %s44 = scalar_select %p41, %s42, %s43
      %p47 = pneg %p41
      %p48 = scmp.eq.s32.totalorder %s18, 3
      %p49 = por %p47, %p48
      %p50 = scmp.ne.s32.totalorder %s42, %s45
      %p51 = scmp.eq.s32.totalorder %s18, 0
      %p52 = por %p50, %p51
      %p53 = scmp.ne.s32.totalorder %s42, %s45
      %p54 = scmp.eq.s32.totalorder %s23, 3
      %p55 = por %p53, %p54
      %p56 = scmp.ne.s32.totalorder %s45, %s46
      %p57 = scmp.eq.s32.totalorder %s23, 0
      %p58 = por %p56, %p57
      %p59 = scmp.ne.s32.totalorder %s45, %s46
      %p60 = scmp.eq.s32.totalorder %s24, 3
      %p61 = por %p59, %p60
      %p63 = scmp.ne.s32.totalorder %s46, %s62
      %p64 = scmp.eq.s32.totalorder %s24, 0
      %p65 = por %p63, %p64
      %s66 = ssub.s32 %s26, %s33
      %p67 = scmp.eq.s32.totalorder %s66, 0
      %s69 = sadd.s32 %s68, 1
      %s70 = scalar_select %p67, %s68, %s69
      %p73 = pneg %p67
      %p74 = scmp.eq.s32.totalorder %s18, 3
      %p75 = por %p73, %p74
      %p76 = scmp.ne.s32.totalorder %s68, %s71
      %p77 = scmp.eq.s32.totalorder %s18, 0
      %p78 = por %p76, %p77
      %p79 = scmp.ne.s32.totalorder %s68, %s71
      %p80 = scmp.eq.s32.totalorder %s23, 3
      %p81 = por %p79, %p80
      %p82 = scmp.ne.s32.totalorder %s71, %s72
      %p83 = scmp.eq.s32.totalorder %s23, 0
      %p84 = por %p82, %p83
      %p85 = scmp.ne.s32.totalorder %s71, %s72
      %p86 = scmp.eq.s32.totalorder %s24, 3
      %p87 = por %p85, %p86
      %p89 = scmp.ne.s32.totalorder %s72, %s88
      %p90 = scmp.eq.s32.totalorder %s24, 0
      %p91 = por %p89, %p90
      %s93 = sadd.s32 %s92, 1
      %p96 = scmp.eq.s32.totalorder %s18, 3
      %p97 = scmp.ne.s32.totalorder %s92, %s94
      %p98 = scmp.eq.s32.totalorder %s18, 0
      %p99 = por %p97, %p98
      %p100 = scmp.ne.s32.totalorder %s92, %s94
      %p101 = scmp.eq.s32.totalorder %s23, 3
      %p102 = por %p100, %p101
      %p103 = scmp.ne.s32.totalorder %s94, %s95
      %p104 = scmp.eq.s32.totalorder %s23, 0
      %p105 = por %p103, %p104
      %p106 = scmp.ne.s32.totalorder %s94, %s95
      %p107 = scmp.eq.s32.totalorder %s24, 3
      %p108 = por %p106, %p107
      %p110 = scmp.ne.s32.totalorder %s95, %s109
      %p111 = scmp.eq.s32.totalorder %s24, 0
      %p112 = por %p110, %p111
      %s113 = ssub.s32 %s25, %s37
      %p114 = scmp.eq.s32.totalorder %s113, 0
      %s116 = sadd.s32 %s115, 1
      %s117 = scalar_select %p114, %s115, %s116
      %p120 = pneg %p114
      %p121 = scmp.eq.s32.totalorder %s18, 3
      %p122 = por %p120, %p121
      %p123 = scmp.ne.s32.totalorder %s115, %s118
      %p124 = scmp.eq.s32.totalorder %s18, 0
      %p125 = por %p123, %p124
      %p126 = scmp.ne.s32.totalorder %s115, %s118
      %p127 = scmp.eq.s32.totalorder %s23, 3
      %p128 = por %p126, %p127
      %p129 = scmp.ne.s32.totalorder %s118, %s119
      %p130 = scmp.eq.s32.totalorder %s23, 0
      %p131 = por %p129, %p130
      %p132 = scmp.ne.s32.totalorder %s118, %s119
      %p133 = scmp.eq.s32.totalorder %s24, 3
      %p134 = por %p132, %p133
      %p136 = scmp.ne.s32.totalorder %s119, %s135
      %p137 = scmp.eq.s32.totalorder %s24, 0
      %p138 = por %p136, %p137
      %p139 = scmp.le.s32.totalorder 1, %s18
      %p140 = scmp.lt.s32.totalorder %s18, 5
      %p141 = pnand %p139, %p140
      %p142 = pneg %p141
      // Predicated region
      $region9: #{tpu_custom_call.1} parent=5 // pred_check
        _
      $region10: #{tpu_custom_call.1} parent=5 // pred_check_branch
        %144 = sbr.rel (%p141) target = $region12
      $region11: #{tpu_custom_call.1} parent=5 // pred_region
        %s145 = ssub.s32 %s18, 1
        // Predicated region
        $region13: #{tpu_custom_call.1} parent=11 // pred_check
          %p146 = pneg %p105
        $region14: #{tpu_custom_call.1} parent=11 // pred_check_branch
          %148 = sbr.rel (%p146) target = $region16
        $region15: #{tpu_custom_call.1} parent=11 // pred_region
          %s150 = ssub.s32 1024, 1024
          %151 = vsyncadd [#allocation7], %s150
          %s152 = sshll.u32 [#allocation8], 4
          %s153 = int_to_ptr.vmem [resolvable:$true] %s152
          %158 = dma.hbm_to_vmem [thread:$0]  %s2, 1024, %s153, [#allocation7], 64, 64, 4
        $region16: #{tpu_custom_call.1} parent=11 // pred_fallthru
          _
      $region12: #{tpu_custom_call.1} parent=5 // pred_fallthru
        _
      %p159 = scmp.lt.s32.totalorder %s18, 4
      // Predicated region
      $region17: #{tpu_custom_call.1} parent=5 // pred_check
        %p160 = pneg %p159
      $region18: #{tpu_custom_call.1} parent=5 // pred_check_branch
        %162 = sbr.rel (%p160) target = $region20
      $region19: #{tpu_custom_call.1} parent=5 // pred_region
        // Predicated region
        $region21: #{tpu_custom_call.1} parent=19 // pred_check
          %p163 = pneg %p52
        $region22: #{tpu_custom_call.1} parent=19 // pred_check_branch
          %165 = sbr.rel (%p163) target = $region24
        $region23: #{tpu_custom_call.1} parent=19 // pred_region
          %s166 = sand.u32 %s42, 1
          %s167 = scalar_lea.sflag [#allocation4], %s166
          %s168 = sand.u32 %s42, 1
          %s169 = smul.addr %s168, 256
          %s170 = scalar_lea.vmem [#allocation3], %s169
          %s171 = smul.u32 32, %s25
          %s172 = smul.u32 2, %s26
          %s174 = ssub.s32 4096, 4096
          %175 = vsyncadd %s167, %s174
          %s176 = smul.addr %s171, 4
          %s177 = sadd.s32 %s172, %s176
          %s178 = smul.addr %s177, 64
          %s179 = scalar_lea.hbm %s0, %s178
          %s180 = sshll.u32 %s170, 4
          %s181 = int_to_ptr.vmem [resolvable:$true] %s180
          %186 = dma.hbm_to_vmem [thread:$0]  %s179, 4096, %s181, %s167, 256, 128, 8
        $region24: #{tpu_custom_call.1} parent=19 // pred_fallthru
          _
        // Predicated region
        $region25: #{tpu_custom_call.1} parent=19 // pred_check
          %p187 = pneg %p78
        $region26: #{tpu_custom_call.1} parent=19 // pred_check_branch
          %189 = sbr.rel (%p187) target = $region28
        $region27: #{tpu_custom_call.1} parent=19 // pred_region
          %s190 = sand.u32 %s18, 1
          %s191 = scalar_lea.sflag [#allocation7], %s190
          %s192 = sand.u32 %s68, 1
          %s193 = smul.addr %s192, 128
          %s194 = scalar_lea.vmem [#allocation6], %s193
          %s195 = smul.u32 32, %s26
          %s197 = ssub.s32 2048, 2048
          %198 = vsyncadd %s191, %s197
          %s199 = smul.addr %s195, 64
          %s200 = scalar_lea.hbm %s1, %s199
          %s201 = sshll.u32 %s194, 4
          %s202 = int_to_ptr.vmem [resolvable:$true] %s201
          %207 = dma.hbm_to_vmem [thread:$0]  %s200, 2048, %s202, %s191, 64, 64, 4
        $region28: #{tpu_custom_call.1} parent=19 // pred_fallthru
          _
      $region20: #{tpu_custom_call.1} parent=5 // pred_fallthru
        _
      %p208 = scmp.le.s32.totalorder 1, %s18
      %p209 = scmp.lt.s32.totalorder %s18, 5
      %p210 = pnand %p208, %p209
      %p211 = pneg %p210
      // Predicated region
      $region29: #{tpu_custom_call.1} parent=5 // pred_check
        _
      $region30: #{tpu_custom_call.1} parent=5 // pred_check_branch
        %213 = sbr.rel (%p210) target = $region32
      $region31: #{tpu_custom_call.1} parent=5 // pred_region
        %s214 = ssub.s32 %s18, 1
        %s215 = sand.u32 %s45, 1
        %s216 = scalar_lea.sflag [#allocation4], %s215
        %s217 = sand.u32 %s45, 1
        %s218 = smul.addr %s217, 256
        %s219 = scalar_lea.vmem [#allocation3], %s218
        // Predicated region
        $region33: #{tpu_custom_call.1} parent=31 // pred_check
          %p220 = pneg %p58
        $region34: #{tpu_custom_call.1} parent=31 // pred_check_branch
          %222 = sbr.rel (%p220) target = $region36
        $region35: #{tpu_custom_call.1} parent=31 // pred_region
          %223 = dma.done %s216, 4096
        $region36: #{tpu_custom_call.1} parent=31 // pred_fallthru
          _
        %s224 = sand.u32 %s23, 1
        %s225 = scalar_lea.sflag [#allocation7], %s224
        %s226 = sand.u32 %s71, 1
        %s227 = smul.addr %s226, 128
        %s228 = scalar_lea.vmem [#allocation6], %s227
        // Predicated region
        $region37: #{tpu_custom_call.1} parent=31 // pred_check
          %p229 = pneg %p84
        $region38: #{tpu_custom_call.1} parent=31 // pred_check_branch
          %231 = sbr.rel (%p229) target = $region40
        $region39: #{tpu_custom_call.1} parent=31 // pred_region
          %232 = dma.done %s225, 2048
        $region40: #{tpu_custom_call.1} parent=31 // pred_fallthru
          _
        // Predicated region
        $region41: #{tpu_custom_call.1} parent=31 // pred_check
          %p233 = pneg %p105
        $region42: #{tpu_custom_call.1} parent=31 // pred_check_branch
          %235 = sbr.rel (%p233) target = $region44
        $region43: #{tpu_custom_call.1} parent=31 // pred_region
          %236 = dma.done [#allocation7], 1024
        $region44: #{tpu_custom_call.1} parent=31 // pred_fallthru
          _
        %s237 = sand.u32 %s45, 1
        %s238 = scalar_lea.sflag [#allocation4], %s237
        %s239 = sand.u32 %s45, 1
        %s240 = smul.addr %s239, 256
        %s241 = scalar_lea.vmem [#allocation3], %s240
        %p242 = pneg %p58
        %p243 = pneg %p55
        %s244 = sand.u32 %s23, 1
        %s245 = scalar_lea.sflag [#allocation7], %s244
        %s246 = sand.u32 %s71, 1
        %s247 = smul.addr %s246, 128
        %s248 = scalar_lea.vmem [#allocation6], %s247
        %p249 = pneg %p84
        %p250 = pneg %p81
        %p251 = pneg %p105
        %p252 = pneg %p102
        %p253 = pneg %p131
        %p254 = pneg %p128
        %s255 = sand.u32 %s118, 1
        %s256 = scalar_lea.sflag [#allocation5], %s255
        %s257 = sand.u32 %s118, 1
        %s258 = smul.addr %s257, 256
        %s259 = scalar_lea.vmem [#allocation9], %s258
        %s260 = smul.u32 32, %s27
        %s261 = smul.u32 2, %s28
        %s262 = smul.u32 32, %s28
        %s263 = smul.u32 32, %s27
        %p265 = scmp.eq.s32.totalorder %s28, 0
        // Predicated region
        $region45: #{tpu_custom_call.1} parent=31 // pred_check
          %p266 = pneg %p265
        $region46: #{tpu_custom_call.1} parent=31 // pred_check_branch
          %268 = sbr.rel (%p266) target = $region48
        $region47: #{tpu_custom_call.1} parent=31 // pred_region
          %269 = vst [vmem:[#allocation2] sm:$0xff] 0.0
          %270 = vst [vmem:[#allocation2 + $0x8] sm:$0xff] 0.0
          %271 = vst [vmem:[#allocation2 + $0x10] sm:$0xff] 0.0
          %272 = vst [vmem:[#allocation2 + $0x18] sm:$0xff] 0.0
          %273 = vst [vmem:[#allocation2 + $0x20] sm:$0xff] 0.0
          %274 = vst [vmem:[#allocation2 + $0x28] sm:$0xff] 0.0
          %275 = vst [vmem:[#allocation2 + $0x30] sm:$0xff] 0.0
          %276 = vst [vmem:[#allocation2 + $0x38] sm:$0xff] 0.0
          %277 = vst [vmem:[#allocation2 + $0x40] sm:$0xff] 0.0
          %278 = vst [vmem:[#allocation2 + $0x48] sm:$0xff] 0.0
          %279 = vst [vmem:[#allocation2 + $0x50] sm:$0xff] 0.0
          %280 = vst [vmem:[#allocation2 + $0x58] sm:$0xff] 0.0
          %281 = vst [vmem:[#allocation2 + $0x60] sm:$0xff] 0.0
          %282 = vst [vmem:[#allocation2 + $0x68] sm:$0xff] 0.0
          %283 = vst [vmem:[#allocation2 + $0x70] sm:$0xff] 0.0
          %284 = vst [vmem:[#allocation2 + $0x78] sm:$0xff] 0.0
          %285 = vst [vmem:[#allocation2 + $0x80] sm:$0xff] 0.0
          %286 = vst [vmem:[#allocation2 + $0x88] sm:$0xff] 0.0
          %287 = vst [vmem:[#allocation2 + $0x90] sm:$0xff] 0.0
          %288 = vst [vmem:[#allocation2 + $0x98] sm:$0xff] 0.0
          %289 = vst [vmem:[#allocation2 + $0xa0] sm:$0xff] 0.0
          %290 = vst [vmem:[#allocation2 + $0xa8] sm:$0xff] 0.0
          %291 = vst [vmem:[#allocation2 + $0xb0] sm:$0xff] 0.0
          %292 = vst [vmem:[#allocation2 + $0xb8] sm:$0xff] 0.0
          %293 = vst [vmem:[#allocation2 + $0xc0] sm:$0xff] 0.0
          %294 = vst [vmem:[#allocation2 + $0xc8] sm:$0xff] 0.0
          %295 = vst [vmem:[#allocation2 + $0xd0] sm:$0xff] 0.0
          %296 = vst [vmem:[#allocation2 + $0xd8] sm:$0xff] 0.0
          %297 = vst [vmem:[#allocation2 + $0xe0] sm:$0xff] 0.0
          %298 = vst [vmem:[#allocation2 + $0xe8] sm:$0xff] 0.0
          %299 = vst [vmem:[#allocation2 + $0xf0] sm:$0xff] 0.0
          %300 = vst [vmem:[#allocation2 + $0xf8] sm:$0xff] 0.0
        $region48: #{tpu_custom_call.1} parent=31 // pred_fallthru
          _
        %v301 = vld [vmem:[#allocation2] sm:$0xff]
        %v302 = vld [vmem:[#allocation2 + $0x8] sm:$0xff]
        %v303 = vld [vmem:[#allocation2 + $0x10] sm:$0xff]
        %v304 = vld [vmem:[#allocation2 + $0x18] sm:$0xff]
        %v305 = vld [vmem:[#allocation2 + $0x20] sm:$0xff]
        %v306 = vld [vmem:[#allocation2 + $0x28] sm:$0xff]
        %v307 = vld [vmem:[#allocation2 + $0x30] sm:$0xff]
        %v308 = vld [vmem:[#allocation2 + $0x38] sm:$0xff]
        %v309 = vld [vmem:[#allocation2 + $0x40] sm:$0xff]
        %v310 = vld [vmem:[#allocation2 + $0x48] sm:$0xff]
        %v311 = vld [vmem:[#allocation2 + $0x50] sm:$0xff]
        %v312 = vld [vmem:[#allocation2 + $0x58] sm:$0xff]
        %v313 = vld [vmem:[#allocation2 + $0x60] sm:$0xff]
        %v314 = vld [vmem:[#allocation2 + $0x68] sm:$0xff]
        %v315 = vld [vmem:[#allocation2 + $0x70] sm:$0xff]
        %v316 = vld [vmem:[#allocation2 + $0x78] sm:$0xff]
        %v317 = vld [vmem:[#allocation2 + $0x80] sm:$0xff]
        %v318 = vld [vmem:[#allocation2 + $0x88] sm:$0xff]
        %v319 = vld [vmem:[#allocation2 + $0x90] sm:$0xff]
        %v320 = vld [vmem:[#allocation2 + $0x98] sm:$0xff]
        %v321 = vld [vmem:[#allocation2 + $0xa0] sm:$0xff]
        %v322 = vld [vmem:[#allocation2 + $0xa8] sm:$0xff]
        %v323 = vld [vmem:[#allocation2 + $0xb0] sm:$0xff]
        %v324 = vld [vmem:[#allocation2 + $0xb8] sm:$0xff]
        %v325 = vld [vmem:[#allocation2 + $0xc0] sm:$0xff]
        %v326 = vld [vmem:[#allocation2 + $0xc8] sm:$0xff]
        %v327 = vld [vmem:[#allocation2 + $0xd0] sm:$0xff]
        %v328 = vld [vmem:[#allocation2 + $0xd8] sm:$0xff]
        %v329 = vld [vmem:[#allocation2 + $0xe0] sm:$0xff]
        %v330 = vld [vmem:[#allocation2 + $0xe8] sm:$0xff]
        %v331 = vld [vmem:[#allocation2 + $0xf0] sm:$0xff]
        %v332 = vld [vmem:[#allocation2 + $0xf8] sm:$0xff]
        %v333 = vld [vmem:[%s219] sm:$0xff]
        %v334 = vld [vmem:[%s219 + $0x8] sm:$0xff]
        %v335 = vld [vmem:[%s219 + $0x10] sm:$0xff]
        %v336 = vld [vmem:[%s219 + $0x18] sm:$0xff]
        %v337 = vld [vmem:[%s219 + $0x20] sm:$0xff]
        %v338 = vld [vmem:[%s219 + $0x28] sm:$0xff]
        %v339 = vld [vmem:[%s219 + $0x30] sm:$0xff]
        %v340 = vld [vmem:[%s219 + $0x38] sm:$0xff]
        %v341 = vld [vmem:[%s219 + $0x40] sm:$0xff]
        %v342 = vld [vmem:[%s219 + $0x48] sm:$0xff]
        %v343 = vld [vmem:[%s219 + $0x50] sm:$0xff]
        %v344 = vld [vmem:[%s219 + $0x58] sm:$0xff]
        %v345 = vld [vmem:[%s219 + $0x60] sm:$0xff]
        %v346 = vld [vmem:[%s219 + $0x68] sm:$0xff]
        %v347 = vld [vmem:[%s219 + $0x70] sm:$0xff]
        %v348 = vld [vmem:[%s219 + $0x78] sm:$0xff]
        %v349 = vld [vmem:[%s219 + $0x80] sm:$0xff]
        %v350 = vld [vmem:[%s219 + $0x88] sm:$0xff]
        %v351 = vld [vmem:[%s219 + $0x90] sm:$0xff]
        %v352 = vld [vmem:[%s219 + $0x98] sm:$0xff]
        %v353 = vld [vmem:[%s219 + $0xa0] sm:$0xff]
        %v354 = vld [vmem:[%s219 + $0xa8] sm:$0xff]
        %v355 = vld [vmem:[%s219 + $0xb0] sm:$0xff]
        %v356 = vld [vmem:[%s219 + $0xb8] sm:$0xff]
        %v357 = vld [vmem:[%s219 + $0xc0] sm:$0xff]
        %v358 = vld [vmem:[%s219 + $0xc8] sm:$0xff]
        %v359 = vld [vmem:[%s219 + $0xd0] sm:$0xff]
        %v360 = vld [vmem:[%s219 + $0xd8] sm:$0xff]
        %v361 = vld [vmem:[%s219 + $0xe0] sm:$0xff]
        %v362 = vld [vmem:[%s219 + $0xe8] sm:$0xff]
        %v363 = vld [vmem:[%s219 + $0xf0] sm:$0xff]
        %v364 = vld [vmem:[%s219 + $0xf8] sm:$0xff]
        %v365 = vld [vmem:[%s228] sm:$0xf]
        %v366 = vld [vmem:[%s228 + $0x4] sm:$0xf]
        %v367 = vld [vmem:[%s228 + $0x8] sm:$0xf]
        %v368 = vld [vmem:[%s228 + $0xc] sm:$0xf]
        %v369 = vld [vmem:[%s228 + $0x10] sm:$0xf]
        %v370 = vld [vmem:[%s228 + $0x14] sm:$0xf]
        %v371 = vld [vmem:[%s228 + $0x18] sm:$0xf]
        %v372 = vld [vmem:[%s228 + $0x1c] sm:$0xf]
        %v373 = vld [vmem:[%s228 + $0x20] sm:$0xf]
        %v374 = vld [vmem:[%s228 + $0x24] sm:$0xf]
        %v375 = vld [vmem:[%s228 + $0x28] sm:$0xf]
        %v376 = vld [vmem:[%s228 + $0x2c] sm:$0xf]
        %v377 = vld [vmem:[%s228 + $0x30] sm:$0xf]
        %v378 = vld [vmem:[%s228 + $0x34] sm:$0xf]
        %v379 = vld [vmem:[%s228 + $0x38] sm:$0xf]
        %v380 = vld [vmem:[%s228 + $0x3c] sm:$0xf]
        %v381 = vld [vmem:[%s228 + $0x40] sm:$0xf]
        %v382 = vld [vmem:[%s228 + $0x44] sm:$0xf]
        %v383 = vld [vmem:[%s228 + $0x48] sm:$0xf]
        %v384 = vld [vmem:[%s228 + $0x4c] sm:$0xf]
        %v385 = vld [vmem:[%s228 + $0x50] sm:$0xf]
        %v386 = vld [vmem:[%s228 + $0x54] sm:$0xf]
        %v387 = vld [vmem:[%s228 + $0x58] sm:$0xf]
        %v388 = vld [vmem:[%s228 + $0x5c] sm:$0xf]
        %v389 = vld [vmem:[%s228 + $0x60] sm:$0xf]
        %v390 = vld [vmem:[%s228 + $0x64] sm:$0xf]
        %v391 = vld [vmem:[%s228 + $0x68] sm:$0xf]
        %v392 = vld [vmem:[%s228 + $0x6c] sm:$0xf]
        %v393 = vld [vmem:[%s228 + $0x70] sm:$0xf]
        %v394 = vld [vmem:[%s228 + $0x74] sm:$0xf]
        %v395 = vld [vmem:[%s228 + $0x78] sm:$0xf]
        %v396 = vld [vmem:[%s228 + $0x7c] sm:$0xf]
        %v429 = vunpack.c.l.b16 %v333
        %v430 = vunpack.c.h.b16 %v333
        %v431 = vunpack.c.l.b16 %v334
        %v432 = vunpack.c.h.b16 %v334
        %v433 = vunpack.c.l.b16 %v335
        %v434 = vunpack.c.h.b16 %v335
        %v435 = vunpack.c.l.b16 %v336
        %v436 = vunpack.c.h.b16 %v336
        %v437 = vunpack.c.l.b16 %v337
        %v438 = vunpack.c.h.b16 %v337
        %v439 = vunpack.c.l.b16 %v338
        %v440 = vunpack.c.h.b16 %v338
        %v441 = vunpack.c.l.b16 %v339
        %v442 = vunpack.c.h.b16 %v339
        %v443 = vunpack.c.l.b16 %v340
        %v444 = vunpack.c.h.b16 %v340
        %v445 = vunpack.c.l.b16 %v341
        %v446 = vunpack.c.h.b16 %v341
        %v447 = vunpack.c.l.b16 %v342
        %v448 = vunpack.c.h.b16 %v342
        %v449 = vunpack.c.l.b16 %v343
        %v450 = vunpack.c.h.b16 %v343
        %v451 = vunpack.c.l.b16 %v344
        %v452 = vunpack.c.h.b16 %v344
        %v453 = vunpack.c.l.b16 %v345
        %v454 = vunpack.c.h.b16 %v345
        %v455 = vunpack.c.l.b16 %v346
        %v456 = vunpack.c.h.b16 %v346
        %v457 = vunpack.c.l.b16 %v347
        %v458 = vunpack.c.h.b16 %v347
        %v459 = vunpack.c.l.b16 %v348
        %v460 = vunpack.c.h.b16 %v348
        %v461 = vunpack.c.l.b16 %v349
        %v462 = vunpack.c.h.b16 %v349
        %v463 = vunpack.c.l.b16 %v350
        %v464 = vunpack.c.h.b16 %v350
        %v465 = vunpack.c.l.b16 %v351
        %v466 = vunpack.c.h.b16 %v351
        %v467 = vunpack.c.l.b16 %v352
        %v468 = vunpack.c.h.b16 %v352
        %v469 = vunpack.c.l.b16 %v353
        %v470 = vunpack.c.h.b16 %v353
        %v471 = vunpack.c.l.b16 %v354
        %v472 = vunpack.c.h.b16 %v354
        %v473 = vunpack.c.l.b16 %v355
        %v474 = vunpack.c.h.b16 %v355
        %v475 = vunpack.c.l.b16 %v356
        %v476 = vunpack.c.h.b16 %v356
        %v477 = vunpack.c.l.b16 %v357
        %v478 = vunpack.c.h.b16 %v357
        %v479 = vunpack.c.l.b16 %v358
        %v480 = vunpack.c.h.b16 %v358
        %v481 = vunpack.c.l.b16 %v359
        %v482 = vunpack.c.h.b16 %v359
        %v483 = vunpack.c.l.b16 %v360
        %v484 = vunpack.c.h.b16 %v360
        %v485 = vunpack.c.l.b16 %v361
        %v486 = vunpack.c.h.b16 %v361
        %v487 = vunpack.c.l.b16 %v362
        %v488 = vunpack.c.h.b16 %v362
        %v489 = vunpack.c.l.b16 %v363
        %v490 = vunpack.c.h.b16 %v363
        %v491 = vunpack.c.l.b16 %v364
        %v492 = vunpack.c.h.b16 %v364
        %v493 = vpack.c.b16 %v431, %v429
        %v494 = vpack.c.b16 %v432, %v430
        %v495 = vpack.c.b16 %v435, %v433
        %v496 = vpack.c.b16 %v436, %v434
        %v497 = vpack.c.b16 %v439, %v437
        %v498 = vpack.c.b16 %v440, %v438
        %v499 = vpack.c.b16 %v443, %v441
        %v500 = vpack.c.b16 %v444, %v442
        %v501 = vpack.c.b16 %v447, %v445
        %v502 = vpack.c.b16 %v448, %v446
        %v503 = vpack.c.b16 %v451, %v449
        %v504 = vpack.c.b16 %v452, %v450
        %v505 = vpack.c.b16 %v455, %v453
        %v506 = vpack.c.b16 %v456, %v454
        %v507 = vpack.c.b16 %v459, %v457
        %v508 = vpack.c.b16 %v460, %v458
        %v509 = vpack.c.b16 %v463, %v461
        %v510 = vpack.c.b16 %v464, %v462
        %v511 = vpack.c.b16 %v467, %v465
        %v512 = vpack.c.b16 %v468, %v466
        %v513 = vpack.c.b16 %v471, %v469
        %v514 = vpack.c.b16 %v472, %v470
        %v515 = vpack.c.b16 %v475, %v473
        %v516 = vpack.c.b16 %v476, %v474
        %v517 = vpack.c.b16 %v479, %v477
        %v518 = vpack.c.b16 %v480, %v478
        %v519 = vpack.c.b16 %v483, %v481
        %v520 = vpack.c.b16 %v484, %v482
        %v521 = vpack.c.b16 %v487, %v485
        %v522 = vpack.c.b16 %v488, %v486
        %v523 = vpack.c.b16 %v491, %v489
        %v524 = vpack.c.b16 %v492, %v490
        %v589 = vunpack.c.l.b16 %v365
        %v590 = vunpack.c.l.b16 %v366
        %v591 = vunpack.c.l.b16 %v367
        %v592 = vunpack.c.l.b16 %v368
        %v593 = vunpack.c.l.b16 %v369
        %v594 = vunpack.c.l.b16 %v370
        %v595 = vunpack.c.l.b16 %v371
        %v596 = vunpack.c.l.b16 %v372
        %v597 = vunpack.c.l.b16 %v373
        %v598 = vunpack.c.l.b16 %v374
        %v599 = vunpack.c.l.b16 %v375
        %v600 = vunpack.c.l.b16 %v376
        %v601 = vunpack.c.l.b16 %v377
        %v602 = vunpack.c.l.b16 %v378
        %v603 = vunpack.c.l.b16 %v379
        %v604 = vunpack.c.l.b16 %v380
        %v605 = vunpack.c.l.b16 %v381
        %v606 = vunpack.c.l.b16 %v382
        %v607 = vunpack.c.l.b16 %v383
        %v608 = vunpack.c.l.b16 %v384
        %v609 = vunpack.c.l.b16 %v385
        %v610 = vunpack.c.l.b16 %v386
        %v611 = vunpack.c.l.b16 %v387
        %v612 = vunpack.c.l.b16 %v388
        %v613 = vunpack.c.l.b16 %v389
        %v614 = vunpack.c.l.b16 %v390
        %v615 = vunpack.c.l.b16 %v391
        %v616 = vunpack.c.l.b16 %v392
        %v617 = vunpack.c.l.b16 %v393
        %v618 = vunpack.c.l.b16 %v394
        %v619 = vunpack.c.l.b16 %v395
        %v620 = vunpack.c.l.b16 %v396
        %v621 = vpack.c.b16 %v590, %v589
        %v622 = vpack.c.b16 %v592, %v591
        %v623 = vpack.c.b16 %v594, %v593
        %v624 = vpack.c.b16 %v596, %v595
        %v625 = vpack.c.b16 %v598, %v597
        %v626 = vpack.c.b16 %v600, %v599
        %v627 = vpack.c.b16 %v602, %v601
        %v628 = vpack.c.b16 %v604, %v603
        %v629 = vpack.c.b16 %v606, %v605
        %v630 = vpack.c.b16 %v608, %v607
        %v631 = vpack.c.b16 %v610, %v609
        %v632 = vpack.c.b16 %v612, %v611
        %v633 = vpack.c.b16 %v614, %v613
        %v634 = vpack.c.b16 %v616, %v615
        %v635 = vpack.c.b16 %v618, %v617
        %v636 = vpack.c.b16 %v620, %v619
        %653 = vmatprep.subr.bf16.mxu0 0
        %654 = vmatpush1.bf16.msra.mxu0 %v628
        %655 = vmatprep.subr.bf16.mxu0 0
        %656 = vmatpush1.bf16.msra.mxu0 %v627
        %657 = vmatprep.subr.bf16.mxu0 0
        %658 = vmatpush1.bf16.msra.mxu0 %v626
        %659 = vmatprep.subr.bf16.mxu0 0
        %660 = vmatpush1.bf16.msra.mxu0 %v625
        %661 = vmatprep.subr.bf16.mxu0 0
        %662 = vmatpush1.bf16.msra.mxu0 %v624
        %663 = vmatprep.subr.bf16.mxu0 0
        %664 = vmatpush1.bf16.msra.mxu0 %v623
        %665 = vmatprep.subr.bf16.mxu0 0
        %666 = vmatpush1.bf16.msra.mxu0 %v622
        %667 = vmatprep.subr.bf16.mxu0 0
        %668 = vmatpush1.bf16.msra.mxu0 %v621
        %669 = vmatprep.subr.bf16.mxu0 0
        %670 = vmatpush2.bf16.msra.mxu0 %v636
        %671 = vmatprep.subr.bf16.mxu0 0
        %672 = vmatpush2.bf16.msra.mxu0 %v635
        %673 = vmatprep.subr.bf16.mxu0 0
        %674 = vmatpush2.bf16.msra.mxu0 %v634
        %675 = vmatprep.subr.bf16.mxu0 0
        %676 = vmatpush2.bf16.msra.mxu0 %v633
        %677 = vmatprep.subr.bf16.mxu0 0
        %678 = vmatpush2.bf16.msra.mxu0 %v632
        %679 = vmatprep.subr.bf16.mxu0 0
        %680 = vmatpush2.bf16.msra.mxu0 %v631
        %681 = vmatprep.subr.bf16.mxu0 0
        %682 = vmatpush2.bf16.msra.mxu0 %v630
        %683 = vmatprep.subr.bf16.mxu0 0
        %684 = vmatpush2.bf16.msra.mxu0 %v629
        %685 = vmatprep.mubr.bf16.mxu0 %v494
        %686 = vmatmul.mubr.bf16.gmra.mxu0 %v493
        %v687 = vpop.f32.mrf.mxu0
        %v688 = vadd.f32 0.0, %v687
        %v689 = vpop.f32.mrf.mxu0
        %v690 = vpop.f32.mrf.mxu0
        %v691 = vadd.f32 0.0, %v690
        %v692 = vpop.f32.mrf.mxu0
        %693 = vmatprep.mubr.bf16.mxu0 %v496
        %694 = vmatmul.mubr.bf16.gmra.mxu0 %v495
        %v695 = vpop.f32.mrf.mxu0
        %v696 = vadd.f32 0.0, %v695
        %v697 = vpop.f32.mrf.mxu0
        %v698 = vpop.f32.mrf.mxu0
        %v699 = vadd.f32 0.0, %v698
        %v700 = vpop.f32.mrf.mxu0
        %701 = vmatprep.mubr.bf16.mxu0 %v498
        %702 = vmatmul.mubr.bf16.gmra.mxu0 %v497
        %v703 = vpop.f32.mrf.mxu0
        %v704 = vadd.f32 0.0, %v703
        %v705 = vpop.f32.mrf.mxu0
        %v706 = vpop.f32.mrf.mxu0
        %v707 = vadd.f32 0.0, %v706
        %v708 = vpop.f32.mrf.mxu0
        %709 = vmatprep.mubr.bf16.mxu0 %v500
        %710 = vmatmul.mubr.bf16.gmra.mxu0 %v499
        %v711 = vpop.f32.mrf.mxu0
        %v712 = vadd.f32 0.0, %v711
        %v713 = vpop.f32.mrf.mxu0
        %v714 = vpop.f32.mrf.mxu0
        %v715 = vadd.f32 0.0, %v714
        %v716 = vpop.f32.mrf.mxu0
        %717 = vmatprep.mubr.bf16.mxu0 %v502
        %718 = vmatmul.mubr.bf16.gmra.mxu0 %v501
        %v719 = vpop.f32.mrf.mxu0
        %v720 = vadd.f32 0.0, %v719
        %v721 = vpop.f32.mrf.mxu0
        %v722 = vpop.f32.mrf.mxu0
        %v723 = vadd.f32 0.0, %v722
        %v724 = vpop.f32.mrf.mxu0
        %725 = vmatprep.mubr.bf16.mxu0 %v504
        %726 = vmatmul.mubr.bf16.gmra.mxu0 %v503
        %v727 = vpop.f32.mrf.mxu0
        %v728 = vadd.f32 0.0, %v727
        %v729 = vpop.f32.mrf.mxu0
        %v730 = vpop.f32.mrf.mxu0
        %v731 = vadd.f32 0.0, %v730
        %v732 = vpop.f32.mrf.mxu0
        %733 = vmatprep.mubr.bf16.mxu0 %v506
        %734 = vmatmul.mubr.bf16.gmra.mxu0 %v505
        %v735 = vpop.f32.mrf.mxu0
        %v736 = vadd.f32 0.0, %v735
        %v737 = vpop.f32.mrf.mxu0
        %v738 = vpop.f32.mrf.mxu0
        %v739 = vadd.f32 0.0, %v738
        %v740 = vpop.f32.mrf.mxu0
        %741 = vmatprep.mubr.bf16.mxu0 %v508
        %742 = vmatmul.mubr.bf16.gmra.mxu0 %v507
        %v743 = vpop.f32.mrf.mxu0
        %v744 = vadd.f32 0.0, %v743
        %v745 = vpop.f32.mrf.mxu0
        %v746 = vpop.f32.mrf.mxu0
        %v747 = vadd.f32 0.0, %v746
        %v748 = vpop.f32.mrf.mxu0
        %749 = vmatprep.mubr.bf16.mxu0 %v510
        %750 = vmatmul.mubr.bf16.gmra.mxu0 %v509
        %v751 = vpop.f32.mrf.mxu0
        %v752 = vadd.f32 0.0, %v751
        %v753 = vpop.f32.mrf.mxu0
        %v754 = vpop.f32.mrf.mxu0
        %v755 = vadd.f32 0.0, %v754
        %v756 = vpop.f32.mrf.mxu0
        %757 = vmatprep.mubr.bf16.mxu0 %v512
        %758 = vmatmul.mubr.bf16.gmra.mxu0 %v511
        %v759 = vpop.f32.mrf.mxu0
        %v760 = vadd.f32 0.0, %v759
        %v761 = vpop.f32.mrf.mxu0
        %v762 = vpop.f32.mrf.mxu0
        %v763 = vadd.f32 0.0, %v762
        %v764 = vpop.f32.mrf.mxu0
        %765 = vmatprep.mubr.bf16.mxu0 %v514
        %766 = vmatmul.mubr.bf16.gmra.mxu0 %v513
        %v767 = vpop.f32.mrf.mxu0
        %v768 = vadd.f32 0.0, %v767
        %v769 = vpop.f32.mrf.mxu0
        %v770 = vpop.f32.mrf.mxu0
        %v771 = vadd.f32 0.0, %v770
        %v772 = vpop.f32.mrf.mxu0
        %773 = vmatprep.mubr.bf16.mxu0 %v516
        %774 = vmatmul.mubr.bf16.gmra.mxu0 %v515
        %v775 = vpop.f32.mrf.mxu0
        %v776 = vadd.f32 0.0, %v775
        %v777 = vpop.f32.mrf.mxu0
        %v778 = vpop.f32.mrf.mxu0
        %v779 = vadd.f32 0.0, %v778
        %v780 = vpop.f32.mrf.mxu0
        %781 = vmatprep.mubr.bf16.mxu0 %v518
        %782 = vmatmul.mubr.bf16.gmra.mxu0 %v517
        %v783 = vpop.f32.mrf.mxu0
        %v784 = vadd.f32 0.0, %v783
        %v785 = vpop.f32.mrf.mxu0
        %v786 = vpop.f32.mrf.mxu0
        %v787 = vadd.f32 0.0, %v786
        %v788 = vpop.f32.mrf.mxu0
        %789 = vmatprep.mubr.bf16.mxu0 %v520
        %790 = vmatmul.mubr.bf16.gmra.mxu0 %v519
        %v791 = vpop.f32.mrf.mxu0
        %v792 = vadd.f32 0.0, %v791
        %v793 = vpop.f32.mrf.mxu0
        %v794 = vpop.f32.mrf.mxu0
        %v795 = vadd.f32 0.0, %v794
        %v796 = vpop.f32.mrf.mxu0
        %797 = vmatprep.mubr.bf16.mxu0 %v522
        %798 = vmatmul.mubr.bf16.gmra.mxu0 %v521
        %v799 = vpop.f32.mrf.mxu0
        %v800 = vadd.f32 0.0, %v799
        %v801 = vpop.f32.mrf.mxu0
        %v802 = vpop.f32.mrf.mxu0
        %v803 = vadd.f32 0.0, %v802
        %v804 = vpop.f32.mrf.mxu0
        %805 = vmatprep.mubr.bf16.mxu0 %v524
        %806 = vmatmul.mubr.bf16.gmra.mxu0 %v523
        %v807 = vpop.f32.mrf.mxu0
        %v808 = vadd.f32 0.0, %v807
        %v809 = vpop.f32.mrf.mxu0
        %v810 = vpop.f32.mrf.mxu0
        %v811 = vadd.f32 0.0, %v810
        %v812 = vpop.f32.mrf.mxu0
        %813 = vdwg.mxu0
        %v814 = vadd.f32 %v301, %v688
        %v815 = vadd.f32 %v302, %v691
        %v816 = vadd.f32 %v303, %v696
        %v817 = vadd.f32 %v304, %v699
        %v818 = vadd.f32 %v305, %v704
        %v819 = vadd.f32 %v306, %v707
        %v820 = vadd.f32 %v307, %v712
        %v821 = vadd.f32 %v308, %v715
        %v822 = vadd.f32 %v309, %v720
        %v823 = vadd.f32 %v310, %v723
        %v824 = vadd.f32 %v311, %v728
        %v825 = vadd.f32 %v312, %v731
        %v826 = vadd.f32 %v313, %v736
        %v827 = vadd.f32 %v314, %v739
        %v828 = vadd.f32 %v315, %v744
        %v829 = vadd.f32 %v316, %v747
        %v830 = vadd.f32 %v317, %v752
        %v831 = vadd.f32 %v318, %v755
        %v832 = vadd.f32 %v319, %v760
        %v833 = vadd.f32 %v320, %v763
        %v834 = vadd.f32 %v321, %v768
        %v835 = vadd.f32 %v322, %v771
        %v836 = vadd.f32 %v323, %v776
        %v837 = vadd.f32 %v324, %v779
        %v838 = vadd.f32 %v325, %v784
        %v839 = vadd.f32 %v326, %v787
        %v840 = vadd.f32 %v327, %v792
        %v841 = vadd.f32 %v328, %v795
        %v842 = vadd.f32 %v329, %v800
        %v843 = vadd.f32 %v330, %v803
        %v844 = vadd.f32 %v331, %v808
        %v845 = vadd.f32 %v332, %v811
        %846 = vst [vmem:[#allocation2] sm:$0xff] %v814
        %847 = vst [vmem:[#allocation2 + $0x8] sm:$0xff] %v815
        %848 = vst [vmem:[#allocation2 + $0x10] sm:$0xff] %v816
        %849 = vst [vmem:[#allocation2 + $0x18] sm:$0xff] %v817
        %850 = vst [vmem:[#allocation2 + $0x20] sm:$0xff] %v818
        %851 = vst [vmem:[#allocation2 + $0x28] sm:$0xff] %v819
        %852 = vst [vmem:[#allocation2 + $0x30] sm:$0xff] %v820
        %853 = vst [vmem:[#allocation2 + $0x38] sm:$0xff] %v821
        %854 = vst [vmem:[#allocation2 + $0x40] sm:$0xff] %v822
        %855 = vst [vmem:[#allocation2 + $0x48] sm:$0xff] %v823
        %856 = vst [vmem:[#allocation2 + $0x50] sm:$0xff] %v824
        %857 = vst [vmem:[#allocation2 + $0x58] sm:$0xff] %v825
        %858 = vst [vmem:[#allocation2 + $0x60] sm:$0xff] %v826
        %859 = vst [vmem:[#allocation2 + $0x68] sm:$0xff] %v827
        %860 = vst [vmem:[#allocation2 + $0x70] sm:$0xff] %v828
        %861 = vst [vmem:[#allocation2 + $0x78] sm:$0xff] %v829
        %862 = vst [vmem:[#allocation2 + $0x80] sm:$0xff] %v830
        %863 = vst [vmem:[#allocation2 + $0x88] sm:$0xff] %v831
        %864 = vst [vmem:[#allocation2 + $0x90] sm:$0xff] %v832
        %865 = vst [vmem:[#allocation2 + $0x98] sm:$0xff] %v833
        %866 = vst [vmem:[#allocation2 + $0xa0] sm:$0xff] %v834
        %867 = vst [vmem:[#allocation2 + $0xa8] sm:$0xff] %v835
        %868 = vst [vmem:[#allocation2 + $0xb0] sm:$0xff] %v836
        %869 = vst [vmem:[#allocation2 + $0xb8] sm:$0xff] %v837
        %870 = vst [vmem:[#allocation2 + $0xc0] sm:$0xff] %v838
        %871 = vst [vmem:[#allocation2 + $0xc8] sm:$0xff] %v839
        %872 = vst [vmem:[#allocation2 + $0xd0] sm:$0xff] %v840
        %873 = vst [vmem:[#allocation2 + $0xd8] sm:$0xff] %v841
        %874 = vst [vmem:[#allocation2 + $0xe0] sm:$0xff] %v842
        %875 = vst [vmem:[#allocation2 + $0xe8] sm:$0xff] %v843
        %876 = vst [vmem:[#allocation2 + $0xf0] sm:$0xff] %v844
        %877 = vst [vmem:[#allocation2 + $0xf8] sm:$0xff] %v845
        %p878 = scmp.eq.s32.totalorder %s28, 1
        // Predicated region
        $region49: #{tpu_custom_call.1} parent=31 // pred_check
          %p879 = pneg %p878
        $region50: #{tpu_custom_call.1} parent=31 // pred_check_branch
          %881 = sbr.rel (%p879) target = $region52
        $region51: #{tpu_custom_call.1} parent=31 // pred_region
          %v882 = vld [vmem:[#allocation2] sm:$0xff]
          %v883 = vld [vmem:[#allocation2 + $0x8] sm:$0xff]
          %v884 = vld [vmem:[#allocation2 + $0x10] sm:$0xff]
          %v885 = vld [vmem:[#allocation2 + $0x18] sm:$0xff]
          %v886 = vld [vmem:[#allocation2 + $0x20] sm:$0xff]
          %v887 = vld [vmem:[#allocation2 + $0x28] sm:$0xff]
          %v888 = vld [vmem:[#allocation2 + $0x30] sm:$0xff]
          %v889 = vld [vmem:[#allocation2 + $0x38] sm:$0xff]
          %v890 = vld [vmem:[#allocation2 + $0x40] sm:$0xff]
          %v891 = vld [vmem:[#allocation2 + $0x48] sm:$0xff]
          %v892 = vld [vmem:[#allocation2 + $0x50] sm:$0xff]
          %v893 = vld [vmem:[#allocation2 + $0x58] sm:$0xff]
          %v894 = vld [vmem:[#allocation2 + $0x60] sm:$0xff]
          %v895 = vld [vmem:[#allocation2 + $0x68] sm:$0xff]
          %v896 = vld [vmem:[#allocation2 + $0x70] sm:$0xff]
          %v897 = vld [vmem:[#allocation2 + $0x78] sm:$0xff]
          %v898 = vld [vmem:[#allocation2 + $0x80] sm:$0xff]
          %v899 = vld [vmem:[#allocation2 + $0x88] sm:$0xff]
          %v900 = vld [vmem:[#allocation2 + $0x90] sm:$0xff]
          %v901 = vld [vmem:[#allocation2 + $0x98] sm:$0xff]
          %v902 = vld [vmem:[#allocation2 + $0xa0] sm:$0xff]
          %v903 = vld [vmem:[#allocation2 + $0xa8] sm:$0xff]
          %v904 = vld [vmem:[#allocation2 + $0xb0] sm:$0xff]
          %v905 = vld [vmem:[#allocation2 + $0xb8] sm:$0xff]
          %v906 = vld [vmem:[#allocation2 + $0xc0] sm:$0xff]
          %v907 = vld [vmem:[#allocation2 + $0xc8] sm:$0xff]
          %v908 = vld [vmem:[#allocation2 + $0xd0] sm:$0xff]
          %v909 = vld [vmem:[#allocation2 + $0xd8] sm:$0xff]
          %v910 = vld [vmem:[#allocation2 + $0xe0] sm:$0xff]
          %v911 = vld [vmem:[#allocation2 + $0xe8] sm:$0xff]
          %v912 = vld [vmem:[#allocation2 + $0xf0] sm:$0xff]
          %v913 = vld [vmem:[#allocation2 + $0xf8] sm:$0xff]
          %v914 = vpack.c.bf16 %v883, %v882
          %v915 = vpack.c.bf16 %v885, %v884
          %v916 = vpack.c.bf16 %v887, %v886
          %v917 = vpack.c.bf16 %v889, %v888
          %v918 = vpack.c.bf16 %v891, %v890
          %v919 = vpack.c.bf16 %v893, %v892
          %v920 = vpack.c.bf16 %v895, %v894
          %v921 = vpack.c.bf16 %v897, %v896
          %v922 = vpack.c.bf16 %v899, %v898
          %v923 = vpack.c.bf16 %v901, %v900
          %v924 = vpack.c.bf16 %v903, %v902
          %v925 = vpack.c.bf16 %v905, %v904
          %v926 = vpack.c.bf16 %v907, %v906
          %v927 = vpack.c.bf16 %v909, %v908
          %v928 = vpack.c.bf16 %v911, %v910
          %v929 = vpack.c.bf16 %v913, %v912
          %v930 = vld [vmem:[#allocation8] sm:$0xf]
          %v931 = vld [vmem:[#allocation8 + $0x4] sm:$0xf]
          %v932 = vld [vmem:[#allocation8 + $0x8] sm:$0xf]
          %v933 = vld [vmem:[#allocation8 + $0xc] sm:$0xf]
          %v934 = vld [vmem:[#allocation8 + $0x10] sm:$0xf]
          %v935 = vld [vmem:[#allocation8 + $0x14] sm:$0xf]
          %v936 = vld [vmem:[#allocation8 + $0x18] sm:$0xf]
          %v937 = vld [vmem:[#allocation8 + $0x1c] sm:$0xf]
          %v938 = vld [vmem:[#allocation8 + $0x20] sm:$0xf]
          %v939 = vld [vmem:[#allocation8 + $0x24] sm:$0xf]
          %v940 = vld [vmem:[#allocation8 + $0x28] sm:$0xf]
          %v941 = vld [vmem:[#allocation8 + $0x2c] sm:$0xf]
          %v942 = vld [vmem:[#allocation8 + $0x30] sm:$0xf]
          %v943 = vld [vmem:[#allocation8 + $0x34] sm:$0xf]
          %v944 = vld [vmem:[#allocation8 + $0x38] sm:$0xf]
          %v945 = vld [vmem:[#allocation8 + $0x3c] sm:$0xf]
          %v962 = vunpack.c.l.b16 %v930
          %v963 = vunpack.c.l.b16 %v931
          %v964 = vunpack.c.l.b16 %v932
          %v965 = vunpack.c.l.b16 %v933
          %v966 = vunpack.c.l.b16 %v934
          %v967 = vunpack.c.l.b16 %v935
          %v968 = vunpack.c.l.b16 %v936
          %v969 = vunpack.c.l.b16 %v937
          %v970 = vunpack.c.l.b16 %v938
          %v971 = vunpack.c.l.b16 %v939
          %v972 = vunpack.c.l.b16 %v940
          %v973 = vunpack.c.l.b16 %v941
          %v974 = vunpack.c.l.b16 %v942
          %v975 = vunpack.c.l.b16 %v943
          %v976 = vunpack.c.l.b16 %v944
          %v977 = vunpack.c.l.b16 %v945
          %v978 = vpack.c.b16 %v963, %v962
          %v979 = vpack.c.b16 %v965, %v964
          %v980 = vpack.c.b16 %v967, %v966
          %v981 = vpack.c.b16 %v969, %v968
          %v982 = vpack.c.b16 %v971, %v970
          %v983 = vpack.c.b16 %v973, %v972
          %v984 = vpack.c.b16 %v975, %v974
          %v985 = vpack.c.b16 %v977, %v976
          %994 = vmatprep.subr.bf16.mxu0 0
          %995 = vmatpush1.bf16.msra.mxu0 %v985
          %996 = vmatprep.subr.bf16.mxu0 0
          %997 = vmatpush1.bf16.msra.mxu0 %v984
          %998 = vmatprep.subr.bf16.mxu0 0
          %999 = vmatpush1.bf16.msra.mxu0 %v983
          %1000 = vmatprep.subr.bf16.mxu0 0
          %1001 = vmatpush1.bf16.msra.mxu0 %v982
          %1002 = vmatprep.subr.bf16.mxu0 0
          %1003 = vmatpush1.bf16.msra.mxu0 %v981
          %1004 = vmatprep.subr.bf16.mxu0 0
          %1005 = vmatpush1.bf16.msra.mxu0 %v980
          %1006 = vmatprep.subr.bf16.mxu0 0
          %1007 = vmatpush1.bf16.msra.mxu0 %v979
          %1008 = vmatprep.subr.bf16.mxu0 0
          %1009 = vmatpush1.bf16.msra.mxu0 %v978
          %1010 = vmatprep.subr.bf16.mxu0 0
          %1011 = vmatpush2.bf16.msra.mxu0 0
          %1012 = vmatprep.subr.bf16.mxu0 0
          %1013 = vmatpush2.bf16.msra.mxu0 0
          %1014 = vmatprep.subr.bf16.mxu0 0
          %1015 = vmatpush2.bf16.msra.mxu0 0
          %1016 = vmatprep.subr.bf16.mxu0 0
          %1017 = vmatpush2.bf16.msra.mxu0 0
          %1018 = vmatprep.subr.bf16.mxu0 0
          %1019 = vmatpush2.bf16.msra.mxu0 0
          %1020 = vmatprep.subr.bf16.mxu0 0
          %1021 = vmatpush2.bf16.msra.mxu0 0
          %1022 = vmatprep.subr.bf16.mxu0 0
          %1023 = vmatpush2.bf16.msra.mxu0 0
          %1024 = vmatprep.subr.bf16.mxu0 0
          %1025 = vmatpush2.bf16.msra.mxu0 0
          %1026 = vmatprep.mubr.bf16.mxu0 0
          %1027 = vmatmul.mubr.bf16.gmra.mxu0 %v914
          %v1028 = vpop.f32.mrf.mxu0
          %v1029 = vadd.f32 0.0, %v1028
          %v1030 = vpop.f32.mrf.mxu0
          %v1031 = vpop.f32.mrf.mxu0
          %v1032 = vadd.f32 0.0, %v1031
          %v1033 = vpop.f32.mrf.mxu0
          %1034 = vmatprep.mubr.bf16.mxu0 0
          %1035 = vmatmul.mubr.bf16.gmra.mxu0 %v915
          %v1036 = vpop.f32.mrf.mxu0
          %v1037 = vadd.f32 0.0, %v1036
          %v1038 = vpop.f32.mrf.mxu0
          %v1039 = vpop.f32.mrf.mxu0
          %v1040 = vadd.f32 0.0, %v1039
          %v1041 = vpop.f32.mrf.mxu0
          %1042 = vmatprep.mubr.bf16.mxu0 0
          %1043 = vmatmul.mubr.bf16.gmra.mxu0 %v916
          %v1044 = vpop.f32.mrf.mxu0
          %v1045 = vadd.f32 0.0, %v1044
          %v1046 = vpop.f32.mrf.mxu0
          %v1047 = vpop.f32.mrf.mxu0
          %v1048 = vadd.f32 0.0, %v1047
          %v1049 = vpop.f32.mrf.mxu0
          %1050 = vmatprep.mubr.bf16.mxu0 0
          %1051 = vmatmul.mubr.bf16.gmra.mxu0 %v917
          %v1052 = vpop.f32.mrf.mxu0
          %v1053 = vadd.f32 0.0, %v1052
          %v1054 = vpop.f32.mrf.mxu0
          %v1055 = vpop.f32.mrf.mxu0
          %v1056 = vadd.f32 0.0, %v1055
          %v1057 = vpop.f32.mrf.mxu0
          %1058 = vmatprep.mubr.bf16.mxu0 0
          %1059 = vmatmul.mubr.bf16.gmra.mxu0 %v918
          %v1060 = vpop.f32.mrf.mxu0
          %v1061 = vadd.f32 0.0, %v1060
          %v1062 = vpop.f32.mrf.mxu0
          %v1063 = vpop.f32.mrf.mxu0
          %v1064 = vadd.f32 0.0, %v1063
          %v1065 = vpop.f32.mrf.mxu0
          %1066 = vmatprep.mubr.bf16.mxu0 0
          %1067 = vmatmul.mubr.bf16.gmra.mxu0 %v919
          %v1068 = vpop.f32.mrf.mxu0
          %v1069 = vadd.f32 0.0, %v1068
          %v1070 = vpop.f32.mrf.mxu0
          %v1071 = vpop.f32.mrf.mxu0
          %v1072 = vadd.f32 0.0, %v1071
          %v1073 = vpop.f32.mrf.mxu0
          %1074 = vmatprep.mubr.bf16.mxu0 0
          %1075 = vmatmul.mubr.bf16.gmra.mxu0 %v920
          %v1076 = vpop.f32.mrf.mxu0
          %v1077 = vadd.f32 0.0, %v1076
          %v1078 = vpop.f32.mrf.mxu0
          %v1079 = vpop.f32.mrf.mxu0
          %v1080 = vadd.f32 0.0, %v1079
          %v1081 = vpop.f32.mrf.mxu0
          %1082 = vmatprep.mubr.bf16.mxu0 0
          %1083 = vmatmul.mubr.bf16.gmra.mxu0 %v921
          %v1084 = vpop.f32.mrf.mxu0
          %v1085 = vadd.f32 0.0, %v1084
          %v1086 = vpop.f32.mrf.mxu0
          %v1087 = vpop.f32.mrf.mxu0
          %v1088 = vadd.f32 0.0, %v1087
          %v1089 = vpop.f32.mrf.mxu0
          %1090 = vmatprep.mubr.bf16.mxu0 0
          %1091 = vmatmul.mubr.bf16.gmra.mxu0 %v922
          %v1092 = vpop.f32.mrf.mxu0
          %v1093 = vadd.f32 0.0, %v1092
          %v1094 = vpop.f32.mrf.mxu0
          %v1095 = vpop.f32.mrf.mxu0
          %v1096 = vadd.f32 0.0, %v1095
          %v1097 = vpop.f32.mrf.mxu0
          %1098 = vmatprep.mubr.bf16.mxu0 0
          %1099 = vmatmul.mubr.bf16.gmra.mxu0 %v923
          %v1100 = vpop.f32.mrf.mxu0
          %v1101 = vadd.f32 0.0, %v1100
          %v1102 = vpop.f32.mrf.mxu0
          %v1103 = vpop.f32.mrf.mxu0
          %v1104 = vadd.f32 0.0, %v1103
          %v1105 = vpop.f32.mrf.mxu0
          %1106 = vmatprep.mubr.bf16.mxu0 0
          %1107 = vmatmul.mubr.bf16.gmra.mxu0 %v924
          %v1108 = vpop.f32.mrf.mxu0
          %v1109 = vadd.f32 0.0, %v1108
          %v1110 = vpop.f32.mrf.mxu0
          %v1111 = vpop.f32.mrf.mxu0
          %v1112 = vadd.f32 0.0, %v1111
          %v1113 = vpop.f32.mrf.mxu0
          %1114 = vmatprep.mubr.bf16.mxu0 0
          %1115 = vmatmul.mubr.bf16.gmra.mxu0 %v925
          %v1116 = vpop.f32.mrf.mxu0
          %v1117 = vadd.f32 0.0, %v1116
          %v1118 = vpop.f32.mrf.mxu0
          %v1119 = vpop.f32.mrf.mxu0
          %v1120 = vadd.f32 0.0, %v1119
          %v1121 = vpop.f32.mrf.mxu0
          %1122 = vmatprep.mubr.bf16.mxu0 0
          %1123 = vmatmul.mubr.bf16.gmra.mxu0 %v926
          %v1124 = vpop.f32.mrf.mxu0
          %v1125 = vadd.f32 0.0, %v1124
          %v1126 = vpop.f32.mrf.mxu0
          %v1127 = vpop.f32.mrf.mxu0
          %v1128 = vadd.f32 0.0, %v1127
          %v1129 = vpop.f32.mrf.mxu0
          %1130 = vmatprep.mubr.bf16.mxu0 0
          %1131 = vmatmul.mubr.bf16.gmra.mxu0 %v927
          %v1132 = vpop.f32.mrf.mxu0
          %v1133 = vadd.f32 0.0, %v1132
          %v1134 = vpop.f32.mrf.mxu0
          %v1135 = vpop.f32.mrf.mxu0
          %v1136 = vadd.f32 0.0, %v1135
          %v1137 = vpop.f32.mrf.mxu0
          %1138 = vmatprep.mubr.bf16.mxu0 0
          %1139 = vmatmul.mubr.bf16.gmra.mxu0 %v928
          %v1140 = vpop.f32.mrf.mxu0
          %v1141 = vadd.f32 0.0, %v1140
          %v1142 = vpop.f32.mrf.mxu0
          %v1143 = vpop.f32.mrf.mxu0
          %v1144 = vadd.f32 0.0, %v1143
          %v1145 = vpop.f32.mrf.mxu0
          %1146 = vmatprep.mubr.bf16.mxu0 0
          %1147 = vmatmul.mubr.bf16.gmra.mxu0 %v929
          %v1148 = vpop.f32.mrf.mxu0
          %v1149 = vadd.f32 0.0, %v1148
          %v1150 = vpop.f32.mrf.mxu0
          %v1151 = vpop.f32.mrf.mxu0
          %v1152 = vadd.f32 0.0, %v1151
          %v1153 = vpop.f32.mrf.mxu0
          %1154 = vdwg.mxu0
          %1155 = vst [vmem:[%s259] sm:$0xff] %v1029
          %1156 = vst [vmem:[%s259 + $0x8] sm:$0xff] %v1032
          %1157 = vst [vmem:[%s259 + $0x10] sm:$0xff] %v1037
          %1158 = vst [vmem:[%s259 + $0x18] sm:$0xff] %v1040
          %1159 = vst [vmem:[%s259 + $0x20] sm:$0xff] %v1045
          %1160 = vst [vmem:[%s259 + $0x28] sm:$0xff] %v1048
          %1161 = vst [vmem:[%s259 + $0x30] sm:$0xff] %v1053
          %1162 = vst [vmem:[%s259 + $0x38] sm:$0xff] %v1056
          %1163 = vst [vmem:[%s259 + $0x40] sm:$0xff] %v1061
          %1164 = vst [vmem:[%s259 + $0x48] sm:$0xff] %v1064
          %1165 = vst [vmem:[%s259 + $0x50] sm:$0xff] %v1069
          %1166 = vst [vmem:[%s259 + $0x58] sm:$0xff] %v1072
          %1167 = vst [vmem:[%s259 + $0x60] sm:$0xff] %v1077
          %1168 = vst [vmem:[%s259 + $0x68] sm:$0xff] %v1080
          %1169 = vst [vmem:[%s259 + $0x70] sm:$0xff] %v1085
          %1170 = vst [vmem:[%s259 + $0x78] sm:$0xff] %v1088
          %1171 = vst [vmem:[%s259 + $0x80] sm:$0xff] %v1093
          %1172 = vst [vmem:[%s259 + $0x88] sm:$0xff] %v1096
          %1173 = vst [vmem:[%s259 + $0x90] sm:$0xff] %v1101
          %1174 = vst [vmem:[%s259 + $0x98] sm:$0xff] %v1104
          %1175 = vst [vmem:[%s259 + $0xa0] sm:$0xff] %v1109
          %1176 = vst [vmem:[%s259 + $0xa8] sm:$0xff] %v1112
          %1177 = vst [vmem:[%s259 + $0xb0] sm:$0xff] %v1117
          %1178 = vst [vmem:[%s259 + $0xb8] sm:$0xff] %v1120
          %1179 = vst [vmem:[%s259 + $0xc0] sm:$0xff] %v1125
          %1180 = vst [vmem:[%s259 + $0xc8] sm:$0xff] %v1128
          %1181 = vst [vmem:[%s259 + $0xd0] sm:$0xff] %v1133
          %1182 = vst [vmem:[%s259 + $0xd8] sm:$0xff] %v1136
          %1183 = vst [vmem:[%s259 + $0xe0] sm:$0xff] %v1141
          %1184 = vst [vmem:[%s259 + $0xe8] sm:$0xff] %v1144
          %1185 = vst [vmem:[%s259 + $0xf0] sm:$0xff] %v1149
          %1186 = vst [vmem:[%s259 + $0xf8] sm:$0xff] %v1152
        $region52: #{tpu_custom_call.1} parent=31 // pred_fallthru
          _
        %s1187 = sand.u32 %s118, 1
        %s1188 = scalar_lea.sflag [#allocation5], %s1187
        %s1189 = sand.u32 %s118, 1
        %s1190 = smul.addr %s1189, 256
        %s1191 = scalar_lea.vmem [#allocation9], %s1190
        // Predicated region
        $region53: #{tpu_custom_call.1} parent=31 // pred_check
          %p1192 = pneg %p128
        $region54: #{tpu_custom_call.1} parent=31 // pred_check_branch
          %1194 = sbr.rel (%p1192) target = $region56
        $region55: #{tpu_custom_call.1} parent=31 // pred_region
          %s1195 = smul.u32 32, %s27
          %s1197 = ssub.s32 4096, 4096
          %1198 = vsyncadd %s1188, %s1197
          %s1199 = smul.addr %s1195, 128
          %s1200 = scalar_lea.hbm %s3, %s1199
          %s1201 = sshll.u32 %s1191, 4
          %s1202 = int_to_ptr.vmem [resolvable:$true] %s1201
          %1207 = dma.vmem_to_hbm [thread:$0]  %s1202, 4096, %s1200, %s1188, 128, 128, 8
        $region56: #{tpu_custom_call.1} parent=31 // pred_fallthru
          _
      $region32: #{tpu_custom_call.1} parent=5 // pred_fallthru
        _
      %p1208 = scmp.le.s32.totalorder 2, %s18
      // Predicated region
      $region57: #{tpu_custom_call.1} parent=5 // pred_check
        %p1209 = pneg %p1208
      $region58: #{tpu_custom_call.1} parent=5 // pred_check_branch
        %1211 = sbr.rel (%p1209) target = $region60
      $region59: #{tpu_custom_call.1} parent=5 // pred_region
        %s1212 = ssub.s32 %s18, 2
        // Predicated region
        $region61: #{tpu_custom_call.1} parent=59 // pred_check
          %p1213 = pneg %p134
        $region62: #{tpu_custom_call.1} parent=59 // pred_check_branch
          %1215 = sbr.rel (%p1213) target = $region64
        $region63: #{tpu_custom_call.1} parent=59 // pred_region
          %s1216 = sand.u32 %s119, 1
          %s1217 = scalar_lea.sflag [#allocation5], %s1216
          %s1218 = sand.u32 %s119, 1
          %s1219 = smul.addr %s1218, 256
          %s1220 = scalar_lea.vmem [#allocation9], %s1219
          %1221 = dma.done %s1217, 4096
        $region64: #{tpu_custom_call.1} parent=59 // pred_fallthru
          _
      $region60: #{tpu_custom_call.1} parent=5 // pred_fallthru
        _
    $region6: #{tpu_custom_call.1} parent=1 // loop_footer
      %s22 = sadd.s32 1, %s18
    $region7: #{tpu_custom_call.1} parent=1 // loop_footer_branch
      %17 = sbr.rel target = $region3
    $region8: #{tpu_custom_call.1} parent=1 // loop_exit
      _
    %1222 = vsyncpa [#allocation4], 1
    %s1223 = scalar_lea.sflag [#allocation4], 1
    %1224 = vsyncpa %s1223, 1
    %1225 = vsyncpa [#allocation7], 1
    %s1226 = scalar_lea.sflag [#allocation7], 1
    %1227 = vsyncpa %s1226, 1
    %1228 = vsyncpa [#allocation5], 1
    %s1229 = scalar_lea.sflag [#allocation5], 1
    %1230 = vsyncpa %s1229, 1

</llo_original>
